<compile_context>
chip_gen: v7x
topology: tpu7x:2x2x1
jax: 0.10.0
libtpu: 0.0.40
codegen_flags: <defaults>
</compile_context>

<pallas_src>
import functools

import numpy as np
import jax
import jax.numpy as jnp
from jax.experimental import pallas as pl
from jax.experimental.pallas import tpu as pltpu


def _round_up(x, m):
    return ((x + m - 1) // m) * m


def _pow2_bucket(n, minimum=8):
    n = max(int(n), minimum)
    return 1 << (n - 1).bit_length()


# ----------------------------------------------------------------------------- kernel
def _meaa_packed_kernel(cond_ref, cls_ref, w1_ref, b1_ref, g_ref, be_ref,
                        w2_ref, b2_ref, stbl_ref, atbl_ref, out_ref,
                        *, num_modalities, h2_true):
    """All modality generators lane-packed; one row tile per grid step.

    Shapes (R = row tile, all lane dims padded to multiples of 128):
      cond : (R, Din_p)   bf16  condition rows  fused[0] ++ one-hot(class), zero padded
      cls  : (R, 1)       int32 per-row class id (-1 on padding rows)
      w1   : (Din_p, H2P) bf16  lanes m*2H:(m+1)*2H hold modality-m Linear-1 weights
      b1 / gamma / beta : (1, H2P) f32
      w2   : (H2P, MHP)   bf16  block-diagonal: rows m*2H.., cols m*H.. = Linear-2[m]
      b2   : (1, MHP)     f32
      stbl / atbl : (C_P, MHP) f32 per-class folded prototype-mix scale / add tables
      out  : (R, MHP)     f32   packed outputs (modality m at lanes m*H:(m+1)*H)
    """
    # ---- Linear-1 for every modality in a single MXU call (lane-packed, bf16 -> f32 acc)
    h = jnp.dot(cond_ref[...], w1_ref[...],
                preferred_element_type=jnp.float32) + b1_ref[...]

    # ---- per-modality LayerNorm over its own 2H-lane segment, one-pass statistics ----
    h2p = h.shape[-1]
    lane = jax.lax.broadcasted_iota(jnp.int32, (1, h2p), 1)
    inv = jnp.float32(1.0 / h2_true)
    mu = jnp.zeros_like(h)
    ex2 = jnp.zeros_like(h)
    for m in range(num_modalities):                     # static unroll, M is tiny
        seg = jnp.logical_and(lane >= m * h2_true,
                              lane < (m + 1) * h2_true).astype(jnp.float32)
        hm = h * seg
        mu = mu + (jnp.sum(hm, axis=-1, keepdims=True) * inv) * seg
        ex2 = ex2 + (jnp.sum(hm * hm, axis=-1, keepdims=True) * inv) * seg
    var = jnp.maximum(ex2 - mu * mu, 0.0)               # biased variance, eps=1e-5
    hn = (h - mu) * jax.lax.rsqrt(var + 1e-5)
    hn = hn * g_ref[...] + be_ref[...]
    # LeakyReLU(0.2)
    hn = jnp.where(hn >= 0, hn, 0.2 * hn)

    # ---- Linear-2 (block-diagonal packed weights, one MXU call for all modalities) ----
    gen = jnp.dot(hn.astype(w2_ref.dtype), w2_ref[...],
                  preferred_element_type=jnp.float32) + b2_ref[...]

    # ---- prototype mixing: gen <- gen * prod(1-corr) + fold(proto*corr)
    # gathered in-kernel from tiny per-class tables via an exact f32 one-hot matmul
    c_pad = stbl_ref.shape[0]
    clane = jax.lax.broadcasted_iota(jnp.int32, (1, c_pad), 1)
    onehot = (cls_ref[...] == clane).astype(jnp.float32)          # (R, C_P)
    scale = jnp.dot(onehot, stbl_ref[...], preferred_element_type=jnp.float32)
    add = jnp.dot(onehot, atbl_ref[...], preferred_element_type=jnp.float32)
    out_ref[...] = gen * scale + add


@functools.lru_cache(maxsize=None)
def _generator_fn(n_pad, din_p, h2p, mhp, c_pad, num_modalities, h2_true):
    """Build (once per shape bucket) the row-tiled, jit-wrapped pallas_call."""
    row_tile = min(n_pad, 512)        # TODO(synk): sweep 256-1024 at production N
    grid = (n_pad // row_tile,)
    kernel = functools.partial(_meaa_packed_kernel,
                               num_modalities=num_modalities, h2_true=h2_true)
    rows = lambda i: (i, 0)           # row-tiled streams
    fixed = lambda i: (0, 0)          # weights / tables stay resident across the grid
    call = pl.pallas_call(
        kernel,
        out_shape=jax.ShapeDtypeStruct((n_pad, mhp), jnp.float32),
        grid_spec=pltpu.PrefetchScalarGridSpec(
            num_scalar_prefetch=0,
            grid=grid,
            in_specs=[
                pl.BlockSpec((row_tile, din_p), rows),   # cond (bf16)
                pl.BlockSpec((row_tile, 1), rows),       # per-row class id (int32)
                pl.BlockSpec((din_p, h2p), fixed),       # w1 packed (bf16)
                pl.BlockSpec((1, h2p), fixed),           # b1
                pl.BlockSpec((1, h2p), fixed),           # gamma
                pl.BlockSpec((1, h2p), fixed),           # beta
                pl.BlockSpec((h2p, mhp), fixed),         # w2 packed block-diag (bf16)
                pl.BlockSpec((1, mhp), fixed),           # b2
                pl.BlockSpec((c_pad, mhp), fixed),       # per-class scale table
                pl.BlockSpec((c_pad, mhp), fixed),       # per-class add table
            ],
            out_specs=pl.BlockSpec((row_tile, mhp), rows),
        ),
        compiler_params=pltpu.CompilerParams(
            dimension_semantics=("parallel",)),          # 2x on v7x (2 TCs) at large N
    )
    return jax.jit(call)


# ------------------------------------------------------------------------ parameters
def init_params(key, hidden_dim, num_modalities, num_classes):
    din = hidden_dim + num_classes
    h2 = hidden_dim * 2
    din_p = _round_up(din, 128)
    h2p = _round_up(num_modalities * h2, 128)
    mhp = _round_up(num_modalities * hidden_dim, 128)
    c_pad = _round_up(num_classes, 128)

    keys = jax.random.split(key, 4 * num_modalities)
    bound1 = 1.0 / np.sqrt(din)
    bound2 = 1.0 / np.sqrt(h2)

    w1p = np.zeros((din_p, h2p), np.float32)
    b1p = np.zeros((1, h2p), np.float32)
    gp = np.zeros((1, h2p), np.float32)
    bp = np.zeros((1, h2p), np.float32)
    w2p = np.zeros((h2p, mhp), np.float32)
    b2p = np.zeros((1, mhp), np.float32)
    for m in range(num_modalities):
        k1, k2, k3, k4 = keys[4 * m:4 * m + 4]
        w1 = np.asarray(jax.random.uniform(k1, (din, h2), jnp.float32, -bound1, bound1))
        b1 = np.asarray(jax.random.uniform(k2, (h2,), jnp.float32, -bound1, bound1))
        w2 = np.asarray(jax.random.uniform(k3, (h2, hidden_dim), jnp.float32,
                                           -bound2, bound2))
        b2 = np.asarray(jax.random.uniform(k4, (hidden_dim,), jnp.float32,
                                           -bound2, bound2))
        cs1, ce1 = m * h2, (m + 1) * h2
        cs2, ce2 = m * hidden_dim, (m + 1) * hidden_dim
        w1p[:din, cs1:ce1] = w1           # lane-packed Linear-1
        b1p[0, cs1:ce1] = b1
        gp[0, cs1:ce1] = 1.0              # LayerNorm gamma / beta defaults
        w2p[cs1:ce1, cs2:ce2] = w2        # block-diagonal Linear-2
        b2p[0, cs2:ce2] = b2

    return dict(
        hidden_dim=hidden_dim, num_modalities=num_modalities, num_classes=num_classes,
        h2=h2, din_pad=din_p, h2_pad=h2p, mh_pad=mhp, c_pad=c_pad,
        # matmul operands pre-cast to bf16 ONCE here (no per-call converts)
        w1=jnp.asarray(w1p, jnp.bfloat16), b1=jnp.asarray(b1p),
        ln_gamma=jnp.asarray(gp), ln_beta=jnp.asarray(bp),
        w2=jnp.asarray(w2p, jnp.bfloat16), b2=jnp.asarray(b2p),
        # matches nn.Parameter(torch.ones(num_modalities, num_modalities))
        modality_correlation=jnp.ones((num_modalities, num_modalities), jnp.float32),
        diversity_weight=jnp.asarray(0.1, jnp.float32),
    )


# ----------------------------------------------------------------- forward (glue + kernel)
def update_memory_bank(bank, counts, features, labels_np, num_classes, num_modalities):
    # TODO(synk): data-dependent per-class means with Python control flow over concrete
    # labels (as in the PyTorch reference) — kept as host-side NumPy glue.
    bank = np.array(bank)
    counts = np.array(counts)
    feats = [None if f is None else np.asarray(f) for f in features]
    for c in range(num_classes):
        mask = labels_np == c
        if not mask.any():
            continue
        for m in range(num_modalities):
            if feats[m] is not None:
                cf = feats[m][mask]
                if cf.shape[0] > 0:
                    bank[c, m] = (bank[c, m] * counts[c] + cf.mean(0)) / (counts[c] + 1)
        counts[c] += 1
    return bank, counts


def generate_balanced_batch(params, bank, counts, fused, labels_np, desired_counts):
    if labels_np is None or labels_np.size == 0 or fused is None:
        return None, None
    C = params["num_classes"]
    M = params["num_modalities"]
    H = params["hidden_dim"]
    din_p = params["din_pad"]
    mhp = params["mh_pad"]
    c_pad = params["c_pad"]

    bank = np.asarray(bank)
    counts = np.asarray(counts)
    label_counts = np.bincount(labels_np, minlength=C)
    gen_classes, gen_counts = [], []
    for c in range(C):
        if (c < len(label_counts) and c < len(desired_counts)
                and label_counts[c] < desired_counts[c] and counts[c] > 0):
            gen_classes.append(c)
            gen_counts.append(int(desired_counts[c] - label_counts[c]))
    if not gen_classes:
        return None, None

    total = int(sum(gen_counts))
    n_pad = _pow2_bucket(total)                 # fixed buckets -> compile-cache hits
    row_classes = np.concatenate(
        [np.full((n,), c, np.int32) for c, n in zip(gen_classes, gen_counts)])

    # condition rows (zero padded to (n_pad, din_pad)):  fused[0] ++ one-hot(class),
    # cast to bf16 on the host so no device-side convert op is emitted.
    fused0 = np.asarray(fused)[0].astype(np.float32)
    cond = np.zeros((n_pad, din_p), np.float32)
    cond[:total, :H] = fused0[None, :]
    cond[np.arange(total), H + row_classes] = 1.0
    cond = cond.astype(jnp.bfloat16)

    cls_idx = np.full((n_pad, 1), -1, np.int32)  # -1 never matches -> scale=0, add=0
    cls_idx[:total, 0] = row_classes

    # Fold the sequential prototype mixing into tiny per-class (scale, add) tables,
    #   gen <- gen*(1-corr) + proto*corr   applied for each other modality in order,
    # gathered in-kernel by the per-row class id (no row-expanded f32 streams).
    corr = np.asarray(params["modality_correlation"])
    scale_tbl = np.zeros((c_pad, mhp), np.float32)
    add_tbl = np.zeros((c_pad, mhp), np.float32)
    for c in gen_classes:
        for m in range(M):
            s = 1.0
            a = np.zeros(H, np.float32)
            for other in range(M):
                if other != m and bank[c, other].sum() > 0:   # same gate as reference
                    cr = float(corr[m, other])
                    s *= (1.0 - cr)
                    a = a * (1.0 - cr) + bank[c, other] * cr
            scale_tbl[c, m * H:(m + 1) * H] = s
            add_tbl[c, m * H:(m + 1) * H] = a

    fn = _generator_fn(n_pad, din_p, params["h2_pad"], mhp, c_pad, M, params["h2"])
    out = fn(jnp.asarray(cond), jnp.asarray(cls_idx),
             params["w1"], params["b1"], params["ln_gamma"], params["ln_beta"],
             params["w2"], params["b2"],
             jnp.asarray(scale_tbl), jnp.asarray(add_tbl))

    # packed output: modality m lives at lanes m*H:(m+1)*H
    augmented_features = [out[:total, m * H:(m + 1) * H] for m in range(M)]
    augmented_labels = row_classes.astype(labels_np.dtype)
    return augmented_features, augmented_labels


def meaa_forward(params, bank, counts, features, fused_representation, labels_np):
    """Mirrors MEAALayer.forward. Returns (features, labels, loss, bank, counts)."""
    if labels_np is None:
        return features, labels_np, jnp.asarray(0.0, jnp.float32), bank, counts

    bank_np, counts_np = update_memory_bank(
        bank, counts, features, labels_np,
        params["num_classes"], params["num_modalities"])

    batch_size = labels_np.shape[0]
    desired_per_class = max(batch_size // params["num_classes"], 1)
    desired_counts = np.full((params["num_classes"],), desired_per_class, np.int64)

    aug_feats, aug_labels = generate_balanced_batch(
        params, bank_np, counts_np, fused_representation, labels_np, desired_counts)

    bank_j = jnp.asarray(bank_np)
    counts_j = jnp.asarray(counts_np)

    if aug_feats is not None and aug_labels is not None and aug_labels.shape[0] > 0:
        # the reference module hard-codes diversity_loss = 0.1
        diversity_loss = jnp.asarray(0.1, jnp.float32)
        combined_features = []
        for m in range(params["num_modalities"]):
            if features[m] is not None and aug_feats[m] is not None:
                combined_features.append(
                    jnp.concatenate([features[m], aug_feats[m]], axis=0))
            elif features[m] is not None:
                combined_features.append(features[m])
            else:
                combined_features.append(aug_feats[m])
        combined_labels = np.concatenate([labels_np, aug_labels])
        return (combined_features, combined_labels,
                diversity_loss * params["diversity_weight"], bank_j, counts_j)

    return features, labels_np, jnp.asarray(0.0, jnp.float32), bank_j, counts_j


# ----------------------------------------------------------------------------- main
if __name__ == "__main__":
    hidden_dim, num_modalities, num_classes = 32, 2, 10
    batch = 24

    key = jax.random.PRNGKey(0)
    k_feat, k_fused, k_params = jax.random.split(key, 3)

    features = [
        jax.random.normal(jax.random.fold_in(k_feat, m), (batch, hidden_dim), jnp.float32)
        for m in range(num_modalities)
    ]
    fused_representation = jax.random.normal(k_fused, (batch, hidden_dim), jnp.float32)
    # classes 5..9 appear exactly once -> each gets (desired=2)-1 = 1 generated sample
    labels_np = np.array([0] * 7 + [1] * 6 + [2] * 2 + [3] * 2 + [4] * 2
                         + [5, 6, 7, 8, 9], dtype=np.int32)
    assert labels_np.shape[0] == batch

    params = init_params(k_params, hidden_dim, num_modalities, num_classes)
    bank = jnp.zeros((num_classes, num_modalities, hidden_dim), jnp.float32)
    counts = jnp.zeros((num_classes,), jnp.float32)

    combined_features, combined_labels, loss, bank, counts = meaa_forward(
        params, bank, counts, features, fused_representation, labels_np)

    for f in combined_features:
        jax.block_until_ready(f)
    jax.block_until_ready(loss)

    expected_rows = batch + 5  # five under-represented classes, one generated sample each
    assert combined_features[0].shape == (expected_rows, hidden_dim)
    assert combined_features[1].shape == (expected_rows, hidden_dim)
    assert combined_labels.shape[0] == expected_rows
    assert np.isfinite(np.asarray(combined_features[0])).all()
    assert np.isfinite(np.asarray(combined_features[1])).all()
    assert np.isfinite(float(loss))

    print("KERNEL_OK")
</pallas_src>

<mosaic_0001>
module attributes {stable_mosaic.version = 11 : i64} {
  func.func @_meaa_packed_kernel(%arg0: i32, %arg1: memref<8x128xbf16, #tpu.memory_space<vmem>>, %arg2: memref<8x1xi32, #tpu.memory_space<vmem>>, %arg3: memref<128x128xbf16, #tpu.memory_space<vmem>>, %arg4: memref<1x128xf32, #tpu.memory_space<vmem>>, %arg5: memref<1x128xf32, #tpu.memory_space<vmem>>, %arg6: memref<1x128xf32, #tpu.memory_space<vmem>>, %arg7: memref<128x128xbf16, #tpu.memory_space<vmem>>, %arg8: memref<1x128xf32, #tpu.memory_space<vmem>>, %arg9: memref<128x128xf32, #tpu.memory_space<vmem>>, %arg10: memref<128x128xf32, #tpu.memory_space<vmem>>, %arg11: memref<8x128xf32, #tpu.memory_space<vmem>>) attributes {dimension_semantics = [#tpu.dimension_semantics<parallel>], iteration_bounds = array<i64: 1>, scalar_prefetch = 0 : i64, scratch_operands = 0 : i64, tpu.core_type = #tpu.core_type<tc>, window_params = [{transform_indices = @transform_0, window_bounds = array<i64: 8, 128>}, {transform_indices = @transform_1, window_bounds = array<i64: 8, 1>}, {pipeline_mode = #tpu.pipeline_mode<synchronous>, transform_indices = @transform_2, window_bounds = array<i64: 128, 128>}, {pipeline_mode = #tpu.pipeline_mode<synchronous>, transform_indices = @transform_3, window_bounds = array<i64: 1, 128>}, {pipeline_mode = #tpu.pipeline_mode<synchronous>, transform_indices = @transform_4, window_bounds = array<i64: 1, 128>}, {pipeline_mode = #tpu.pipeline_mode<synchronous>, transform_indices = @transform_5, window_bounds = array<i64: 1, 128>}, {pipeline_mode = #tpu.pipeline_mode<synchronous>, transform_indices = @transform_6, window_bounds = array<i64: 128, 128>}, {pipeline_mode = #tpu.pipeline_mode<synchronous>, transform_indices = @transform_7, window_bounds = array<i64: 1, 128>}, {pipeline_mode = #tpu.pipeline_mode<synchronous>, transform_indices = @transform_8, window_bounds = array<i64: 128, 128>}, {pipeline_mode = #tpu.pipeline_mode<synchronous>, transform_indices = @transform_9, window_bounds = array<i64: 128, 128>}, {transform_indices = @transform_10, window_bounds = array<i64: 8, 128>}]} {
    %c0 = arith.constant 0 : index
    %c0_0 = arith.constant 0 : index
    %0 = vector.load %arg1[%c0, %c0_0] : memref<8x128xbf16, #tpu.memory_space<vmem>>, vector<8x128xbf16>
    %c0_1 = arith.constant 0 : index
    %c0_2 = arith.constant 0 : index
    %1 = vector.load %arg3[%c0_1, %c0_2] : memref<128x128xbf16, #tpu.memory_space<vmem>>, vector<128x128xbf16>
    %cst = arith.constant dense<0.000000e+00> : vector<8x128xf32>
    %2 = tpu.matmul %0, %1, %cst {dimension_numbers = #tpu.dot_dimension_numbers<[1], [0], [0], [1], [0, 0, 1, 1], [], []>} : vector<8x128xbf16>, vector<128x128xbf16>, vector<8x128xf32> -> vector<8x128xf32>
    %c0_3 = arith.constant 0 : index
    %c0_4 = arith.constant 0 : index
    %3 = vector.load %arg4[%c0_3, %c0_4] : memref<1x128xf32, #tpu.memory_space<vmem>>, vector<1x128xf32>
    %4 = vector.broadcast %3 : vector<1x128xf32> to vector<8x128xf32>
    %5 = arith.addf %2, %4 : vector<8x128xf32>
    %6 = tpu.iota {dimensions = array<i32: 1>} : vector<1x128xi32>
    %cst_5 = arith.constant 0.000000e+00 : f32
    %7 = vector.broadcast %cst_5 : f32 to vector<8x128xf32>
    %cst_6 = arith.constant 0.000000e+00 : f32
    %8 = vector.broadcast %cst_6 : f32 to vector<8x128xf32>
    %c0_i32 = arith.constant 0 : i32
    %9 = vector.broadcast %c0_i32 : i32 to vector<1x128xi32>
    %10 = arith.cmpi sge, %6, %9 : vector<1x128xi32>
    %c64_i32 = arith.constant 64 : i32
    %11 = vector.broadcast %c64_i32 : i32 to vector<1x128xi32>
    %12 = arith.cmpi slt, %6, %11 : vector<1x128xi32>
    %13 = arith.andi %10, %12 : vector<1x128xi1>
    %14 = arith.extui %13 : vector<1x128xi1> to vector<1x128xi32>
    %15 = arith.sitofp %14 : vector<1x128xi32> to vector<1x128xf32>
    %16 = vector.broadcast %15 : vector<1x128xf32> to vector<8x128xf32>
    %17 = arith.mulf %5, %16 : vector<8x128xf32>
    %cst_7 = arith.constant dense<0.000000e+00> : vector<8xf32>
    %18 = vector.multi_reduction <add>, %17, %cst_7 [1] : vector<8x128xf32> to vector<8xf32>
    %19 = vector.shape_cast %18 : vector<8xf32> to vector<8x1xf32>
    %cst_8 = arith.constant 1.562500e-02 : f32
    %20 = vector.broadcast %cst_8 : f32 to vector<8x1xf32>
    %21 = arith.mulf %19, %20 : vector<8x1xf32>
    %22 = vector.broadcast %21 : vector<8x1xf32> to vector<8x128xf32>
    %23 = vector.broadcast %15 : vector<1x128xf32> to vector<8x128xf32>
    %24 = arith.mulf %22, %23 : vector<8x128xf32>
    %25 = arith.addf %7, %24 : vector<8x128xf32>
    %26 = arith.mulf %17, %17 : vector<8x128xf32>
    %cst_9 = arith.constant dense<0.000000e+00> : vector<8xf32>
    %27 = vector.multi_reduction <add>, %26, %cst_9 [1] : vector<8x128xf32> to vector<8xf32>
    %28 = vector.shape_cast %27 : vector<8xf32> to vector<8x1xf32>
    %cst_10 = arith.constant 1.562500e-02 : f32
    %29 = vector.broadcast %cst_10 : f32 to vector<8x1xf32>
    %30 = arith.mulf %28, %29 : vector<8x1xf32>
    %31 = vector.broadcast %30 : vector<8x1xf32> to vector<8x128xf32>
    %32 = vector.broadcast %15 : vector<1x128xf32> to vector<8x128xf32>
    %33 = arith.mulf %31, %32 : vector<8x128xf32>
    %34 = arith.addf %8, %33 : vector<8x128xf32>
    %c64_i32_11 = arith.constant 64 : i32
    %35 = vector.broadcast %c64_i32_11 : i32 to vector<1x128xi32>
    %36 = arith.cmpi sge, %6, %35 : vector<1x128xi32>
    %c128_i32 = arith.constant 128 : i32
    %37 = vector.broadcast %c128_i32 : i32 to vector<1x128xi32>
    %38 = arith.cmpi slt, %6, %37 : vector<1x128xi32>
    %39 = arith.andi %36, %38 : vector<1x128xi1>
    %40 = arith.extui %39 : vector<1x128xi1> to vector<1x128xi32>
    %41 = arith.sitofp %40 : vector<1x128xi32> to vector<1x128xf32>
    %42 = vector.broadcast %41 : vector<1x128xf32> to vector<8x128xf32>
    %43 = arith.mulf %5, %42 : vector<8x128xf32>
    %cst_12 = arith.constant dense<0.000000e+00> : vector<8xf32>
    %44 = vector.multi_reduction <add>, %43, %cst_12 [1] : vector<8x128xf32> to vector<8xf32>
    %45 = vector.shape_cast %44 : vector<8xf32> to vector<8x1xf32>
    %cst_13 = arith.constant 1.562500e-02 : f32
    %46 = vector.broadcast %cst_13 : f32 to vector<8x1xf32>
    %47 = arith.mulf %45, %46 : vector<8x1xf32>
    %48 = vector.broadcast %47 : vector<8x1xf32> to vector<8x128xf32>
    %49 = vector.broadcast %41 : vector<1x128xf32> to vector<8x128xf32>
    %50 = arith.mulf %48, %49 : vector<8x128xf32>
    %51 = arith.addf %25, %50 : vector<8x128xf32>
    %52 = arith.mulf %43, %43 : vector<8x128xf32>
    %cst_14 = arith.constant dense<0.000000e+00> : vector<8xf32>
    %53 = vector.multi_reduction <add>, %52, %cst_14 [1] : vector<8x128xf32> to vector<8xf32>
    %54 = vector.shape_cast %53 : vector<8xf32> to vector<8x1xf32>
    %cst_15 = arith.constant 1.562500e-02 : f32
    %55 = vector.broadcast %cst_15 : f32 to vector<8x1xf32>
    %56 = arith.mulf %54, %55 : vector<8x1xf32>
    %57 = vector.broadcast %56 : vector<8x1xf32> to vector<8x128xf32>
    %58 = vector.broadcast %41 : vector<1x128xf32> to vector<8x128xf32>
    %59 = arith.mulf %57, %58 : vector<8x128xf32>
    %60 = arith.addf %34, %59 : vector<8x128xf32>
    %61 = arith.mulf %51, %51 : vector<8x128xf32>
    %62 = arith.subf %60, %61 : vector<8x128xf32>
    %cst_16 = arith.constant 0.000000e+00 : f32
    %63 = vector.broadcast %cst_16 : f32 to vector<8x128xf32>
    %64 = arith.maximumf %62, %63 : vector<8x128xf32>
    %65 = arith.subf %5, %51 : vector<8x128xf32>
    %cst_17 = arith.constant 9.99999974E-6 : f32
    %66 = vector.broadcast %cst_17 : f32 to vector<8x128xf32>
    %67 = arith.addf %64, %66 : vector<8x128xf32>
    %68 = math.rsqrt %67 : vector<8x128xf32>
    %69 = arith.mulf %65, %68 : vector<8x128xf32>
    %c0_18 = arith.constant 0 : index
    %c0_19 = arith.constant 0 : index
    %70 = vector.load %arg5[%c0_18, %c0_19] : memref<1x128xf32, #tpu.memory_space<vmem>>, vector<1x128xf32>
    %71 = vector.broadcast %70 : vector<1x128xf32> to vector<8x128xf32>
    %72 = arith.mulf %69, %71 : vector<8x128xf32>
    %c0_20 = arith.constant 0 : index
    %c0_21 = arith.constant 0 : index
    %73 = vector.load %arg6[%c0_20, %c0_21] : memref<1x128xf32, #tpu.memory_space<vmem>>, vector<1x128xf32>
    %74 = vector.broadcast %73 : vector<1x128xf32> to vector<8x128xf32>
    %75 = arith.addf %72, %74 : vector<8x128xf32>
    %cst_22 = arith.constant 0.000000e+00 : f32
    %76 = vector.broadcast %cst_22 : f32 to vector<8x128xf32>
    %77 = arith.cmpf oge, %75, %76 : vector<8x128xf32>
    %cst_23 = arith.constant 2.000000e-01 : f32
    %78 = vector.broadcast %cst_23 : f32 to vector<8x128xf32>
    %79 = arith.mulf %78, %75 : vector<8x128xf32>
    %80 = arith.select %77, %75, %79 : vector<8x128xi1>, vector<8x128xf32>
    %81 = arith.truncf %80 : vector<8x128xf32> to vector<8x128xbf16>
    %c0_24 = arith.constant 0 : index
    %c0_25 = arith.constant 0 : index
    %82 = vector.load %arg7[%c0_24, %c0_25] : memref<128x128xbf16, #tpu.memory_space<vmem>>, vector<128x128xbf16>
    %cst_26 = arith.constant dense<0.000000e+00> : vector<8x128xf32>
    %83 = tpu.matmul %81, %82, %cst_26 {dimension_numbers = #tpu.dot_dimension_numbers<[1], [0], [0], [1], [0, 0, 1, 1], [], []>} : vector<8x128xbf16>, vector<128x128xbf16>, vector<8x128xf32> -> vector<8x128xf32>
    %c0_27 = arith.constant 0 : index
    %c0_28 = arith.constant 0 : index
    %84 = vector.load %arg8[%c0_27, %c0_28] : memref<1x128xf32, #tpu.memory_space<vmem>>, vector<1x128xf32>
    %85 = vector.broadcast %84 : vector<1x128xf32> to vector<8x128xf32>
    %86 = arith.addf %83, %85 : vector<8x128xf32>
    %87 = tpu.iota {dimensions = array<i32: 1>} : vector<1x128xi32>
    %c0_29 = arith.constant 0 : index
    %c0_30 = arith.constant 0 : index
    %88 = vector.load %arg2[%c0_29, %c0_30] : memref<8x1xi32, #tpu.memory_space<vmem>>, vector<8x1xi32>
    %89 = vector.broadcast %88 : vector<8x1xi32> to vector<8x128xi32>
    %90 = vector.broadcast %87 : vector<1x128xi32> to vector<8x128xi32>
    %91 = arith.cmpi eq, %89, %90 : vector<8x128xi32>
    %92 = arith.extui %91 : vector<8x128xi1> to vector<8x128xi32>
    %93 = arith.sitofp %92 : vector<8x128xi32> to vector<8x128xf32>
    %c0_31 = arith.constant 0 : index
    %c0_32 = arith.constant 0 : index
    %94 = vector.load %arg9[%c0_31, %c0_32] : memref<128x128xf32, #tpu.memory_space<vmem>>, vector<128x128xf32>
    %cst_33 = arith.constant dense<0.000000e+00> : vector<8x128xf32>
    %95 = tpu.matmul %93, %94, %cst_33 {dimension_numbers = #tpu.dot_dimension_numbers<[1], [0], [0], [1], [0, 0, 1, 1], [], []>} : vector<8x128xf32>, vector<128x128xf32>, vector<8x128xf32> -> vector<8x128xf32>
    %c0_34 = arith.constant 0 : index
    %c0_35 = arith.constant 0 : index
    %96 = vector.load %arg10[%c0_34, %c0_35] : memref<128x128xf32, #tpu.memory_space<vmem>>, vector<128x128xf32>
    %cst_36 = arith.constant dense<0.000000e+00> : vector<8x128xf32>
    %97 = tpu.matmul %93, %96, %cst_36 {dimension_numbers = #tpu.dot_dimension_numbers<[1], [0], [0], [1], [0, 0, 1, 1], [], []>} : vector<8x128xf32>, vector<128x128xf32>, vector<8x128xf32> -> vector<8x128xf32>
    %98 = arith.mulf %86, %95 : vector<8x128xf32>
    %99 = arith.addf %98, %97 : vector<8x128xf32>
    %c0_37 = arith.constant 0 : index
    %c0_38 = arith.constant 0 : index
    %100 = vector.load %arg11[%c0_37, %c0_38] : memref<8x128xf32, #tpu.memory_space<vmem>>, vector<8x128xf32>
    tpu.vector_store %arg11[%c0_37, %c0_38], %99 {strides = array<i32>} : memref<8x128xf32, #tpu.memory_space<vmem>>, vector<8x128xf32>,
    return
  }
  func.func @transform_0(%arg0: i32) -> (i32, i32) {
    %c0_i32 = arith.constant 0 : i32
    %c0_i32_0 = arith.constant 0 : i32
    return %arg0, %c0_i32 : i32, i32
  }
  func.func @transform_1(%arg0: i32) -> (i32, i32) {
    %c0_i32 = arith.constant 0 : i32
    %c0_i32_0 = arith.constant 0 : i32
    return %arg0, %c0_i32 : i32, i32
  }
  func.func @transform_2(%arg0: i32) -> (i32, i32) {
    %c0_i32 = arith.constant 0 : i32
    %c0_i32_0 = arith.constant 0 : i32
    %c0_i32_1 = arith.constant 0 : i32
    return %c0_i32, %c0_i32_0 : i32, i32
  }
  func.func @transform_3(%arg0: i32) -> (i32, i32) {
    %c0_i32 = arith.constant 0 : i32
    %c0_i32_0 = arith.constant 0 : i32
    %c0_i32_1 = arith.constant 0 : i32
    return %c0_i32, %c0_i32_0 : i32, i32
  }
  func.func @transform_4(%arg0: i32) -> (i32, i32) {
    %c0_i32 = arith.constant 0 : i32
    %c0_i32_0 = arith.constant 0 : i32
    %c0_i32_1 = arith.constant 0 : i32
    return %c0_i32, %c0_i32_0 : i32, i32
  }
  func.func @transform_5(%arg0: i32) -> (i32, i32) {
    %c0_i32 = arith.constant 0 : i32
    %c0_i32_0 = arith.constant 0 : i32
    %c0_i32_1 = arith.constant 0 : i32
    return %c0_i32, %c0_i32_0 : i32, i32
  }
  func.func @transform_6(%arg0: i32) -> (i32, i32) {
    %c0_i32 = arith.constant 0 : i32
    %c0_i32_0 = arith.constant 0 : i32
    %c0_i32_1 = arith.constant 0 : i32
    return %c0_i32, %c0_i32_0 : i32, i32
  }
  func.func @transform_7(%arg0: i32) -> (i32, i32) {
    %c0_i32 = arith.constant 0 : i32
    %c0_i32_0 = arith.constant 0 : i32
    %c0_i32_1 = arith.constant 0 : i32
    return %c0_i32, %c0_i32_0 : i32, i32
  }
  func.func @transform_8(%arg0: i32) -> (i32, i32) {
    %c0_i32 = arith.constant 0 : i32
    %c0_i32_0 = arith.constant 0 : i32
    %c0_i32_1 = arith.constant 0 : i32
    return %c0_i32, %c0_i32_0 : i32, i32
  }
  func.func @transform_9(%arg0: i32) -> (i32, i32) {
    %c0_i32 = arith.constant 0 : i32
    %c0_i32_0 = arith.constant 0 : i32
    %c0_i32_1 = arith.constant 0 : i32
    return %c0_i32, %c0_i32_0 : i32, i32
  }
  func.func @transform_10(%arg0: i32) -> (i32, i32) {
    %c0_i32 = arith.constant 0 : i32
    %c0_i32_0 = arith.constant 0 : i32
    return %arg0, %c0_i32 : i32, i32
  }
}

</mosaic_0001>

<llo_original>
// kernel: tpu_custom_call.1
$region0: #{tpu_custom_call.1}
  #allocation0 [shape = 'u32[]', space=smem, size = 0x4, offset = 0x4, fixed_abs, tag = 'smem constant byte address 0x4 - core index']
  #allocation1 [shape = 'u32[144,128]{1,0:T(1,128)}', space=vmem, size = 0x12000, scoped, tag = 'internal scratch']
  %s0 = inlined_call_operand.vmem [shape: bf16[8,128], index: 0, kind: input, shape index: {}]
  %s1 = inlined_call_operand.vmem [shape: s32[8,1], index: 1, kind: input, shape index: {}]
  %s2 = inlined_call_operand.hbm [shape: bf16[128,128], index: 2, kind: input, shape index: {}]
  %s3 = inlined_call_operand.vmem [shape: f32[1,128], index: 3, kind: input, shape index: {}]
  %s4 = inlined_call_operand.vmem [shape: f32[1,128], index: 4, kind: input, shape index: {}]
  %s5 = inlined_call_operand.vmem [shape: f32[1,128], index: 5, kind: input, shape index: {}]
  %s6 = inlined_call_operand.hbm [shape: bf16[128,128], index: 6, kind: input, shape index: {}]
  %s7 = inlined_call_operand.vmem [shape: f32[1,128], index: 7, kind: input, shape index: {}]
  %s8 = inlined_call_operand.hbm [shape: f32[128,128], index: 8, kind: input, shape index: {}]
  %s9 = inlined_call_operand.hbm [shape: f32[128,128], index: 9, kind: input, shape index: {}]
  %s10 = inlined_call_operand.hbm [shape: f32[8,128], index: 10, kind: output, shape index: {}]
  %s11 = sld [smem:[#allocation0]]
  $region66: #{tpu_custom_call.1} parent=0
    _
  %s13 = ssub.s32 1, %s11
  %s14 = scalar_select 0, %s13, %s11
  $region1: #{tpu_custom_call.1} parent=0
    #allocation2 [shape = 'u8[32768]{0}', space=vmem, size = 0x8000, scoped, tag = 'input window, operand 2, single buffered']
    #allocation3 [shape = 's32[1]{0}', space=sflag, size = 0x4, scoped, tag = 'scoped memory for tpu_custom_call.1']
    #allocation4 [shape = 's32[1]{0}', space=sflag, size = 0x4, scoped, tag = 'scoped memory for tpu_custom_call.1']
    #allocation5 [shape = 'u8[32768]{0}', space=vmem, size = 0x8000, scoped, tag = 'input window, operand 6, single buffered']
    #allocation6 [shape = 's32[1]{0}', space=sflag, size = 0x4, scoped, tag = 'scoped memory for tpu_custom_call.1']
    #allocation7 [shape = 'u8[65536]{0}', space=vmem, size = 0x10000, scoped, tag = 'input window, operand 8, single buffered']
    #allocation8 [shape = 'u8[65536]{0}', space=vmem, size = 0x10000, scoped, tag = 'input window, operand 9, single buffered']
    #allocation9 [shape = 's32[1]{0}', space=sflag, size = 0x4, scoped, tag = 'scoped memory for tpu_custom_call.1']
    #allocation10 [shape = 'u8[4096]{0}', space=vmem, size = 0x1000, scoped, tag = 'output window, operand 0, single buffered']
    %15 = vsyncpa [#allocation3], 0
    %16 = vsyncpa [#allocation6], 0
    %17 = vsyncpa [#allocation9], 0
    %18 = vsyncpa [#allocation4], 0
    // Predicated region
    $region2: #{tpu_custom_call.1} parent=1 // pred_check
      _
    $region3: #{tpu_custom_call.1} parent=1 // pred_check_branch
      %20 = sbr.rel (0) target = $region5
    $region4: #{tpu_custom_call.1} parent=1 // pred_region
      _
    $region5: #{tpu_custom_call.1} parent=1 // pred_fallthru
      _
    // Predicated region
    $region6: #{tpu_custom_call.1} parent=1 // pred_check
      _
    $region7: #{tpu_custom_call.1} parent=1 // pred_check_branch
      %22 = sbr.rel (0) target = $region9
    $region8: #{tpu_custom_call.1} parent=1 // pred_region
      _
    $region9: #{tpu_custom_call.1} parent=1 // pred_fallthru
      _
    // Predicated region
    $region10: #{tpu_custom_call.1} parent=1 // pred_check
      _
    $region11: #{tpu_custom_call.1} parent=1 // pred_check_branch
      %24 = sbr.rel (0) target = $region13
    $region12: #{tpu_custom_call.1} parent=1 // pred_region
      %s26 = ssub.s32 1024, 1024
      %27 = vsyncadd [#allocation3], %s26
      %s28 = sshll.u32 [#allocation2], 4
      %s29 = int_to_ptr.vmem [resolvable:$true] %s28
      %34 = dma.hbm_to_vmem [thread:$0]  %s2, 1024, %s29, [#allocation3], 64, 64, 4
    $region13: #{tpu_custom_call.1} parent=1 // pred_fallthru
      _
    // Predicated region
    $region14: #{tpu_custom_call.1} parent=1 // pred_check
      _
    $region15: #{tpu_custom_call.1} parent=1 // pred_check_branch
      %36 = sbr.rel (0) target = $region17
    $region16: #{tpu_custom_call.1} parent=1 // pred_region
      _
    $region17: #{tpu_custom_call.1} parent=1 // pred_fallthru
      _
    // Predicated region
    $region18: #{tpu_custom_call.1} parent=1 // pred_check
      _
    $region19: #{tpu_custom_call.1} parent=1 // pred_check_branch
      %38 = sbr.rel (0) target = $region21
    $region20: #{tpu_custom_call.1} parent=1 // pred_region
      _
    $region21: #{tpu_custom_call.1} parent=1 // pred_fallthru
      _
    // Predicated region
    $region22: #{tpu_custom_call.1} parent=1 // pred_check
      _
    $region23: #{tpu_custom_call.1} parent=1 // pred_check_branch
      %40 = sbr.rel (0) target = $region25
    $region24: #{tpu_custom_call.1} parent=1 // pred_region
      _
    $region25: #{tpu_custom_call.1} parent=1 // pred_fallthru
      _
    // Predicated region
    $region26: #{tpu_custom_call.1} parent=1 // pred_check
      _
    $region27: #{tpu_custom_call.1} parent=1 // pred_check_branch
      %42 = sbr.rel (0) target = $region29
    $region28: #{tpu_custom_call.1} parent=1 // pred_region
      %s44 = ssub.s32 1024, 1024
      %45 = vsyncadd [#allocation6], %s44
      %s46 = sshll.u32 [#allocation5], 4
      %s47 = int_to_ptr.vmem [resolvable:$true] %s46
      %52 = dma.hbm_to_vmem [thread:$0]  %s6, 1024, %s47, [#allocation6], 64, 64, 4
    $region29: #{tpu_custom_call.1} parent=1 // pred_fallthru
      _
    // Predicated region
    $region30: #{tpu_custom_call.1} parent=1 // pred_check
      _
    $region31: #{tpu_custom_call.1} parent=1 // pred_check_branch
      %54 = sbr.rel (0) target = $region33
    $region32: #{tpu_custom_call.1} parent=1 // pred_region
      _
    $region33: #{tpu_custom_call.1} parent=1 // pred_fallthru
      _
    // Predicated region
    $region34: #{tpu_custom_call.1} parent=1 // pred_check
      _
    $region35: #{tpu_custom_call.1} parent=1 // pred_check_branch
      %56 = sbr.rel (0) target = $region37
    $region36: #{tpu_custom_call.1} parent=1 // pred_region
      %s58 = ssub.s32 2048, 2048
      %59 = vsyncadd [#allocation6], %s58
      %s60 = sshll.u32 [#allocation7], 4
      %s61 = int_to_ptr.vmem [resolvable:$true] %s60
      %66 = dma.hbm_to_vmem [thread:$0]  %s8, 2048, %s61, [#allocation6], 128, 128, 8
    $region37: #{tpu_custom_call.1} parent=1 // pred_fallthru
      _
    // Predicated region
    $region38: #{tpu_custom_call.1} parent=1 // pred_check
      _
    $region39: #{tpu_custom_call.1} parent=1 // pred_check_branch
      %68 = sbr.rel (0) target = $region41
    $region40: #{tpu_custom_call.1} parent=1 // pred_region
      %s70 = ssub.s32 2048, 2048
      %71 = vsyncadd [#allocation9], %s70
      %s72 = sshll.u32 [#allocation8], 4
      %s73 = int_to_ptr.vmem [resolvable:$true] %s72
      %78 = dma.hbm_to_vmem [thread:$0]  %s9, 2048, %s73, [#allocation9], 128, 128, 8
    $region41: #{tpu_custom_call.1} parent=1 // pred_fallthru
      _
    // Predicated region
    $region42: #{tpu_custom_call.1} parent=1 // pred_check
      _
    $region43: #{tpu_custom_call.1} parent=1 // pred_check_branch
      %80 = sbr.rel (0) target = $region45
    $region44: #{tpu_custom_call.1} parent=1 // pred_region
      %81 = dma.done [#allocation3], 1024
    $region45: #{tpu_custom_call.1} parent=1 // pred_fallthru
      _
    // Predicated region
    $region46: #{tpu_custom_call.1} parent=1 // pred_check
      _
    $region47: #{tpu_custom_call.1} parent=1 // pred_check_branch
      %83 = sbr.rel (0) target = $region49
    $region48: #{tpu_custom_call.1} parent=1 // pred_region
      %84 = dma.done [#allocation6], 1024
    $region49: #{tpu_custom_call.1} parent=1 // pred_fallthru
      _
    // Predicated region
    $region50: #{tpu_custom_call.1} parent=1 // pred_check
      _
    $region51: #{tpu_custom_call.1} parent=1 // pred_check_branch
      %86 = sbr.rel (0) target = $region53
    $region52: #{tpu_custom_call.1} parent=1 // pred_region
      %87 = dma.done [#allocation6], 2048
    $region53: #{tpu_custom_call.1} parent=1 // pred_fallthru
      _
    // Predicated region
    $region54: #{tpu_custom_call.1} parent=1 // pred_check
      _
    $region55: #{tpu_custom_call.1} parent=1 // pred_check_branch
      %89 = sbr.rel (0) target = $region57
    $region56: #{tpu_custom_call.1} parent=1 // pred_region
      %90 = dma.done [#allocation9], 2048
    $region57: #{tpu_custom_call.1} parent=1 // pred_fallthru
      _
    %v92 = vld [vmem:[%s0] sm:$0xf]
    %v93 = vld [vmem:[#allocation2] sm:$0xf]
    %v94 = vld [vmem:[#allocation2 + $0x4] sm:$0xf]
    %v95 = vld [vmem:[#allocation2 + $0x8] sm:$0xf]
    %v96 = vld [vmem:[#allocation2 + $0xc] sm:$0xf]
    %v97 = vld [vmem:[#allocation2 + $0x10] sm:$0xf]
    %v98 = vld [vmem:[#allocation2 + $0x14] sm:$0xf]
    %v99 = vld [vmem:[#allocation2 + $0x18] sm:$0xf]
    %v100 = vld [vmem:[#allocation2 + $0x1c] sm:$0xf]
    %v101 = vld [vmem:[#allocation2 + $0x20] sm:$0xf]
    %v102 = vld [vmem:[#allocation2 + $0x24] sm:$0xf]
    %v103 = vld [vmem:[#allocation2 + $0x28] sm:$0xf]
    %v104 = vld [vmem:[#allocation2 + $0x2c] sm:$0xf]
    %v105 = vld [vmem:[#allocation2 + $0x30] sm:$0xf]
    %v106 = vld [vmem:[#allocation2 + $0x34] sm:$0xf]
    %v107 = vld [vmem:[#allocation2 + $0x38] sm:$0xf]
    %v108 = vld [vmem:[#allocation2 + $0x3c] sm:$0xf]
    %v109 = vld [vmem:[%s3] sm:$0x1]
    %v111 = vlaneseq
    %v112 = vshrl.u32 %v111, 7
    %v113 = vsub.s32 0, %v112
    %v114 = vrot.slane %v109, %v113
    %v132 = vunpack.c.l.b16 %v93
    %v133 = vunpack.c.l.b16 %v94
    %v134 = vunpack.c.l.b16 %v95
    %v135 = vunpack.c.l.b16 %v96
    %v136 = vunpack.c.l.b16 %v97
    %v137 = vunpack.c.l.b16 %v98
    %v138 = vunpack.c.l.b16 %v99
    %v139 = vunpack.c.l.b16 %v100
    %v140 = vunpack.c.l.b16 %v101
    %v141 = vunpack.c.l.b16 %v102
    %v142 = vunpack.c.l.b16 %v103
    %v143 = vunpack.c.l.b16 %v104
    %v144 = vunpack.c.l.b16 %v105
    %v145 = vunpack.c.l.b16 %v106
    %v146 = vunpack.c.l.b16 %v107
    %v147 = vunpack.c.l.b16 %v108
    %v148 = vpack.c.b16 %v133, %v132
    %v149 = vpack.c.b16 %v135, %v134
    %v150 = vpack.c.b16 %v137, %v136
    %v151 = vpack.c.b16 %v139, %v138
    %v152 = vpack.c.b16 %v141, %v140
    %v153 = vpack.c.b16 %v143, %v142
    %v154 = vpack.c.b16 %v145, %v144
    %v155 = vpack.c.b16 %v147, %v146
    %164 = vmatprep.subr.bf16.mxu0 0
    %165 = vmatpush1.bf16.msra.mxu0 %v148
    %166 = vmatprep.subr.bf16.mxu0 0
    %167 = vmatpush1.bf16.msra.mxu0 %v149
    %168 = vmatprep.subr.bf16.mxu0 0
    %169 = vmatpush1.bf16.msra.mxu0 %v150
    %170 = vmatprep.subr.bf16.mxu0 0
    %171 = vmatpush1.bf16.msra.mxu0 %v151
    %172 = vmatprep.subr.bf16.mxu0 0
    %173 = vmatpush1.bf16.msra.mxu0 %v152
    %174 = vmatprep.subr.bf16.mxu0 0
    %175 = vmatpush1.bf16.msra.mxu0 %v153
    %176 = vmatprep.subr.bf16.mxu0 0
    %177 = vmatpush1.bf16.msra.mxu0 %v154
    %178 = vmatprep.subr.bf16.mxu0 0
    %179 = vmatpush1.bf16.msra.mxu0 %v155
    %180 = vmatprep.subr.bf16.mxu0 0
    %181 = vmatpush1.bf16.msra.mxu0 0
    %182 = vmatprep.subr.bf16.mxu0 0
    %183 = vmatpush1.bf16.msra.mxu0 0
    %184 = vmatprep.subr.bf16.mxu0 0
    %185 = vmatpush1.bf16.msra.mxu0 0
    %186 = vmatprep.subr.bf16.mxu0 0
    %187 = vmatpush1.bf16.msra.mxu0 0
    %188 = vmatprep.subr.bf16.mxu0 0
    %189 = vmatpush1.bf16.msra.mxu0 0
    %190 = vmatprep.subr.bf16.mxu0 0
    %191 = vmatpush1.bf16.msra.mxu0 0
    %192 = vmatprep.subr.bf16.mxu0 0
    %193 = vmatpush1.bf16.msra.mxu0 0
    %194 = vmatprep.subr.bf16.mxu0 0
    %195 = vmatpush1.bf16.msra.mxu0 0
    %196 = vmatprep.mubr.bf16.mxu0 0
    %197 = vmatmul.mubr.bf16.gmra.mrb[0].mxu0 %v92
    %v198 = vpop.f32.mrb[0].mxu0
    %v199 = vadd.f32 %v114, %v198
    %v200 = vpop.f32.mrb[0].mxu0
    %v201 = vpop.f32.mrb[0].mxu0
    %v202 = vpop.f32.mrb[0].mxu0
    %203 = vdwg.mxu0
    %v204 = vlaneseq
    %v205 = vand.u32 %v204, 127
    %vm206 = vcmp.ge.s32.totalorder %v205, 0
    %vm207 = vcmp.lt.s32.totalorder %v205, 64
    %vm208 = vmand %vm206, %vm207
    %v209 = vsel %vm208, 1, 0
    %v210 = vcvt.s32.f32 %v209
    %v211 = vmul.f32 %v199, %v210
    %212 = vadd.xlane.f32.xlu0 %v211
    %v213 = vpop.xlane.xlu0 %212
    %v214 = vmul.f32 %v213, 0.015625
    %v215 = vmul.f32 %v214, %v210
    %v216 = vadd.f32 %v215, 0.0
    %v217 = vmul.f32 %v211, %v211
    %218 = vadd.xlane.f32.xlu0 %v217
    %v219 = vpop.xlane.xlu0 %218
    %v220 = vmul.f32 %v219, 0.015625
    %v221 = vmul.f32 %v220, %v210
    %v222 = vadd.f32 %v221, 0.0
    %vm223 = vcmp.ge.s32.totalorder %v205, 64
    %vm224 = vcmp.lt.s32.totalorder %v205, 128
    %vm225 = vmand %vm223, %vm224
    %v226 = vsel %vm225, 1, 0
    %v227 = vcvt.s32.f32 %v226
    %v228 = vmul.f32 %v199, %v227
    %229 = vadd.xlane.f32.xlu0 %v228
    %v230 = vpop.xlane.xlu0 %229
    %v231 = vmul.f32 %v230, 0.015625
    %v232 = vmul.f32 %v231, %v227
    %v233 = vadd.f32 %v216, %v232
    %v234 = vmul.f32 %v228, %v228
    %235 = vadd.xlane.f32.xlu0 %v234
    %v236 = vpop.xlane.xlu0 %235
    %v237 = vmul.f32 %v236, 0.015625
    %v238 = vmul.f32 %v237, %v227
    %v239 = vadd.f32 %v222, %v238
    %v240 = vmul.f32 %v233, %v233
    %v241 = vsub.f32 %v239, %v240
    %v242 = vmax.f32 %v241, 0.0
    %v243 = vsub.f32 %v199, %v233
    %v244 = vadd.f32 %v242, 1e-05
    %v245 = vrsqrt.pop %v244
    %v246 = vmul.f32 %v243, %v245
    %v247 = vld [vmem:[%s4] sm:$0x1]
    %v249 = vlaneseq
    %v250 = vshrl.u32 %v249, 7
    %v251 = vsub.s32 0, %v250
    %v252 = vrot.slane %v247, %v251
    %v254 = vmul.f32 %v246, %v252
    %v255 = vld [vmem:[%s5] sm:$0x1]
    %v257 = vlaneseq
    %v258 = vshrl.u32 %v257, 7
    %v259 = vsub.s32 0, %v258
    %v260 = vrot.slane %v255, %v259
    %v262 = vadd.f32 %v254, %v260
    %vm263 = vcmp.ge.f32.partialorder %v262, 0.0
    %v264 = vmul.f32 %v262, 0.2
    %v265 = vsel %vm263, %v262, %v264
    %v266 = vpack.c.bf16 %v265, %v265
    %v267 = vld [vmem:[#allocation5] sm:$0xf]
    %v268 = vld [vmem:[#allocation5 + $0x4] sm:$0xf]
    %v269 = vld [vmem:[#allocation5 + $0x8] sm:$0xf]
    %v270 = vld [vmem:[#allocation5 + $0xc] sm:$0xf]
    %v271 = vld [vmem:[#allocation5 + $0x10] sm:$0xf]
    %v272 = vld [vmem:[#allocation5 + $0x14] sm:$0xf]
    %v273 = vld [vmem:[#allocation5 + $0x18] sm:$0xf]
    %v274 = vld [vmem:[#allocation5 + $0x1c] sm:$0xf]
    %v275 = vld [vmem:[#allocation5 + $0x20] sm:$0xf]
    %v276 = vld [vmem:[#allocation5 + $0x24] sm:$0xf]
    %v277 = vld [vmem:[#allocation5 + $0x28] sm:$0xf]
    %v278 = vld [vmem:[#allocation5 + $0x2c] sm:$0xf]
    %v279 = vld [vmem:[#allocation5 + $0x30] sm:$0xf]
    %v280 = vld [vmem:[#allocation5 + $0x34] sm:$0xf]
    %v281 = vld [vmem:[#allocation5 + $0x38] sm:$0xf]
    %v282 = vld [vmem:[#allocation5 + $0x3c] sm:$0xf]
    %v283 = vld [vmem:[%s7] sm:$0x1]
    %v285 = vlaneseq
    %v286 = vshrl.u32 %v285, 7
    %v287 = vsub.s32 0, %v286
    %v288 = vrot.slane %v283, %v287
    %v306 = vunpack.c.l.b16 %v267
    %v307 = vunpack.c.l.b16 %v268
    %v308 = vunpack.c.l.b16 %v269
    %v309 = vunpack.c.l.b16 %v270
    %v310 = vunpack.c.l.b16 %v271
    %v311 = vunpack.c.l.b16 %v272
    %v312 = vunpack.c.l.b16 %v273
    %v313 = vunpack.c.l.b16 %v274
    %v314 = vunpack.c.l.b16 %v275
    %v315 = vunpack.c.l.b16 %v276
    %v316 = vunpack.c.l.b16 %v277
    %v317 = vunpack.c.l.b16 %v278
    %v318 = vunpack.c.l.b16 %v279
    %v319 = vunpack.c.l.b16 %v280
    %v320 = vunpack.c.l.b16 %v281
    %v321 = vunpack.c.l.b16 %v282
    %v322 = vpack.c.b16 %v307, %v306
    %v323 = vpack.c.b16 %v309, %v308
    %v324 = vpack.c.b16 %v311, %v310
    %v325 = vpack.c.b16 %v313, %v312
    %v326 = vpack.c.b16 %v315, %v314
    %v327 = vpack.c.b16 %v317, %v316
    %v328 = vpack.c.b16 %v319, %v318
    %v329 = vpack.c.b16 %v321, %v320
    %338 = vmatprep.subr.bf16.mxu0 0
    %339 = vmatpush1.bf16.msra.mxu0 %v322
    %340 = vmatprep.subr.bf16.mxu0 0
    %341 = vmatpush1.bf16.msra.mxu0 %v323
    %342 = vmatprep.subr.bf16.mxu0 0
    %343 = vmatpush1.bf16.msra.mxu0 %v324
    %344 = vmatprep.subr.bf16.mxu0 0
    %345 = vmatpush1.bf16.msra.mxu0 %v325
    %346 = vmatprep.subr.bf16.mxu0 0
    %347 = vmatpush1.bf16.msra.mxu0 %v326
    %348 = vmatprep.subr.bf16.mxu0 0
    %349 = vmatpush1.bf16.msra.mxu0 %v327
    %350 = vmatprep.subr.bf16.mxu0 0
    %351 = vmatpush1.bf16.msra.mxu0 %v328
    %352 = vmatprep.subr.bf16.mxu0 0
    %353 = vmatpush1.bf16.msra.mxu0 %v329
    %354 = vmatprep.subr.bf16.mxu0 0
    %355 = vmatpush1.bf16.msra.mxu0 0
    %356 = vmatprep.subr.bf16.mxu0 0
    %357 = vmatpush1.bf16.msra.mxu0 0
    %358 = vmatprep.subr.bf16.mxu0 0
    %359 = vmatpush1.bf16.msra.mxu0 0
    %360 = vmatprep.subr.bf16.mxu0 0
    %361 = vmatpush1.bf16.msra.mxu0 0
    %362 = vmatprep.subr.bf16.mxu0 0
    %363 = vmatpush1.bf16.msra.mxu0 0
    %364 = vmatprep.subr.bf16.mxu0 0
    %365 = vmatpush1.bf16.msra.mxu0 0
    %366 = vmatprep.subr.bf16.mxu0 0
    %367 = vmatpush1.bf16.msra.mxu0 0
    %368 = vmatprep.subr.bf16.mxu0 0
    %369 = vmatpush1.bf16.msra.mxu0 0
    %370 = vmatprep.mubr.bf16.mxu0 0
    %371 = vmatmul.mubr.bf16.gmra.mrb[0].mxu0 %v266
    %v372 = vpop.f32.mrb[0].mxu0
    %v373 = vadd.f32 %v288, %v372
    %v374 = vpop.f32.mrb[0].mxu0
    %v375 = vpop.f32.mrb[0].mxu0
    %v376 = vpop.f32.mrb[0].mxu0
    %377 = vdwg.mxu0
    %v378 = vld [vmem:[%s1] sm:$0xff]
    %379 = vset.pattern.permute.xlu0 0
    %380 = vperm.xlu0 %379, %v378
    %v381 = vpop.permute.xlu0 %380
    %vm382 = vcmp.eq.s32.totalorder %v381, %v205
    %v383 = vsel %vm382, 1, 0
    %v384 = vcvt.s32.f32 %v383
    %v385 = vld [vmem:[#allocation7] sm:$0xff]
    %v386 = vld [vmem:[#allocation7 + $0x8] sm:$0xff]
    %v387 = vld [vmem:[#allocation7 + $0x10] sm:$0xff]
    %v388 = vld [vmem:[#allocation7 + $0x18] sm:$0xff]
    %v389 = vld [vmem:[#allocation7 + $0x20] sm:$0xff]
    %v390 = vld [vmem:[#allocation7 + $0x28] sm:$0xff]
    %v391 = vld [vmem:[#allocation7 + $0x30] sm:$0xff]
    %v392 = vld [vmem:[#allocation7 + $0x38] sm:$0xff]
    %v393 = vld [vmem:[#allocation7 + $0x40] sm:$0xff]
    %v394 = vld [vmem:[#allocation7 + $0x48] sm:$0xff]
    %v395 = vld [vmem:[#allocation7 + $0x50] sm:$0xff]
    %v396 = vld [vmem:[#allocation7 + $0x58] sm:$0xff]
    %v397 = vld [vmem:[#allocation7 + $0x60] sm:$0xff]
    %v398 = vld [vmem:[#allocation7 + $0x68] sm:$0xff]
    %v399 = vld [vmem:[#allocation7 + $0x70] sm:$0xff]
    %v400 = vld [vmem:[#allocation7 + $0x78] sm:$0xff]
    %401 = vmatprep.subr.mxu0 0.0
    %402 = vmatpush1.msra.mxu0 %v385
    %403 = vmatprep.subr.mxu0 0.0
    %404 = vmatpush1.msra.mxu0 %v386
    %405 = vmatprep.subr.mxu0 0.0
    %406 = vmatpush1.msra.mxu0 %v387
    %407 = vmatprep.subr.mxu0 0.0
    %408 = vmatpush1.msra.mxu0 %v388
    %409 = vmatprep.subr.mxu0 0.0
    %410 = vmatpush1.msra.mxu0 %v389
    %411 = vmatprep.subr.mxu0 0.0
    %412 = vmatpush1.msra.mxu0 %v390
    %413 = vmatprep.subr.mxu0 0.0
    %414 = vmatpush1.msra.mxu0 %v391
    %415 = vmatprep.subr.mxu0 0.0
    %416 = vmatpush1.msra.mxu0 %v392
    %417 = vmatprep.subr.mxu0 0.0
    %418 = vmatpush1.msra.mxu0 %v393
    %419 = vmatprep.subr.mxu0 0.0
    %420 = vmatpush1.msra.mxu0 %v394
    %421 = vmatprep.subr.mxu0 0.0
    %422 = vmatpush1.msra.mxu0 %v395
    %423 = vmatprep.subr.mxu0 0.0
    %424 = vmatpush1.msra.mxu0 %v396
    %425 = vmatprep.subr.mxu0 0.0
    %426 = vmatpush1.msra.mxu0 %v397
    %427 = vmatprep.subr.mxu0 0.0
    %428 = vmatpush1.msra.mxu0 %v398
    %429 = vmatprep.subr.mxu0 0.0
    %430 = vmatpush1.msra.mxu0 %v399
    %431 = vmatprep.subr.mxu0 0.0
    %432 = vmatpush1.msra.mxu0 %v400
    %433 = vmatprep.subr.mxu0 0.0
    %434 = vmatpush1.msra.mxu0 0.0
    %435 = vmatprep.subr.mxu0 0.0
    %436 = vmatpush1.msra.mxu0 0.0
    %437 = vmatprep.subr.mxu0 0.0
    %438 = vmatpush1.msra.mxu0 0.0
    %439 = vmatprep.subr.mxu0 0.0
    %440 = vmatpush1.msra.mxu0 0.0
    %441 = vmatprep.subr.mxu0 0.0
    %442 = vmatpush1.msra.mxu0 0.0
    %443 = vmatprep.subr.mxu0 0.0
    %444 = vmatpush1.msra.mxu0 0.0
    %445 = vmatprep.subr.mxu0 0.0
    %446 = vmatpush1.msra.mxu0 0.0
    %447 = vmatprep.subr.mxu0 0.0
    %448 = vmatpush1.msra.mxu0 0.0
    %449 = vmatprep.subr.mxu0 0.0
    %450 = vmatpush1.msra.mxu0 0.0
    %451 = vmatprep.subr.mxu0 0.0
    %452 = vmatpush1.msra.mxu0 0.0
    %453 = vmatprep.subr.mxu0 0.0
    %454 = vmatpush1.msra.mxu0 0.0
    %455 = vmatprep.subr.mxu0 0.0
    %456 = vmatpush1.msra.mxu0 0.0
    %457 = vmatprep.subr.mxu0 0.0
    %458 = vmatpush1.msra.mxu0 0.0
    %459 = vmatprep.subr.mxu0 0.0
    %460 = vmatpush1.msra.mxu0 0.0
    %461 = vmatprep.subr.mxu0 0.0
    %462 = vmatpush1.msra.mxu0 0.0
    %463 = vmatprep.subr.mxu0 0.0
    %464 = vmatpush1.msra.mxu0 0.0
    %465 = vmatprep.mubr.f32.mxu0 0.0
    %466 = vmatmul.mubr.f32.gmra.mrb[0].mxu0 %v384
    %v467 = vpop.f32.mrb[0].mxu0
    %v468 = vadd.f32 0.0, %v467
    %v469 = vpop.f32.mrb[0].mxu0
    %470 = vdwg.mxu0
    %v471 = vld [vmem:[#allocation8] sm:$0xff]
    %v472 = vld [vmem:[#allocation8 + $0x8] sm:$0xff]
    %v473 = vld [vmem:[#allocation8 + $0x10] sm:$0xff]
    %v474 = vld [vmem:[#allocation8 + $0x18] sm:$0xff]
    %v475 = vld [vmem:[#allocation8 + $0x20] sm:$0xff]
    %v476 = vld [vmem:[#allocation8 + $0x28] sm:$0xff]
    %v477 = vld [vmem:[#allocation8 + $0x30] sm:$0xff]
    %v478 = vld [vmem:[#allocation8 + $0x38] sm:$0xff]
    %v479 = vld [vmem:[#allocation8 + $0x40] sm:$0xff]
    %v480 = vld [vmem:[#allocation8 + $0x48] sm:$0xff]
    %v481 = vld [vmem:[#allocation8 + $0x50] sm:$0xff]
    %v482 = vld [vmem:[#allocation8 + $0x58] sm:$0xff]
    %v483 = vld [vmem:[#allocation8 + $0x60] sm:$0xff]
    %v484 = vld [vmem:[#allocation8 + $0x68] sm:$0xff]
    %v485 = vld [vmem:[#allocation8 + $0x70] sm:$0xff]
    %v486 = vld [vmem:[#allocation8 + $0x78] sm:$0xff]
    %487 = vmatprep.subr.mxu0 0.0
    %488 = vmatpush1.msra.mxu0 %v471
    %489 = vmatprep.subr.mxu0 0.0
    %490 = vmatpush1.msra.mxu0 %v472
    %491 = vmatprep.subr.mxu0 0.0
    %492 = vmatpush1.msra.mxu0 %v473
    %493 = vmatprep.subr.mxu0 0.0
    %494 = vmatpush1.msra.mxu0 %v474
    %495 = vmatprep.subr.mxu0 0.0
    %496 = vmatpush1.msra.mxu0 %v475
    %497 = vmatprep.subr.mxu0 0.0
    %498 = vmatpush1.msra.mxu0 %v476
    %499 = vmatprep.subr.mxu0 0.0
    %500 = vmatpush1.msra.mxu0 %v477
    %501 = vmatprep.subr.mxu0 0.0
    %502 = vmatpush1.msra.mxu0 %v478
    %503 = vmatprep.subr.mxu0 0.0
    %504 = vmatpush1.msra.mxu0 %v479
    %505 = vmatprep.subr.mxu0 0.0
    %506 = vmatpush1.msra.mxu0 %v480
    %507 = vmatprep.subr.mxu0 0.0
    %508 = vmatpush1.msra.mxu0 %v481
    %509 = vmatprep.subr.mxu0 0.0
    %510 = vmatpush1.msra.mxu0 %v482
    %511 = vmatprep.subr.mxu0 0.0
    %512 = vmatpush1.msra.mxu0 %v483
    %513 = vmatprep.subr.mxu0 0.0
    %514 = vmatpush1.msra.mxu0 %v484
    %515 = vmatprep.subr.mxu0 0.0
    %516 = vmatpush1.msra.mxu0 %v485
    %517 = vmatprep.subr.mxu0 0.0
    %518 = vmatpush1.msra.mxu0 %v486
    %519 = vmatprep.subr.mxu0 0.0
    %520 = vmatpush1.msra.mxu0 0.0
    %521 = vmatprep.subr.mxu0 0.0
    %522 = vmatpush1.msra.mxu0 0.0
    %523 = vmatprep.subr.mxu0 0.0
    %524 = vmatpush1.msra.mxu0 0.0
    %525 = vmatprep.subr.mxu0 0.0
    %526 = vmatpush1.msra.mxu0 0.0
    %527 = vmatprep.subr.mxu0 0.0
    %528 = vmatpush1.msra.mxu0 0.0
    %529 = vmatprep.subr.mxu0 0.0
    %530 = vmatpush1.msra.mxu0 0.0
    %531 = vmatprep.subr.mxu0 0.0
    %532 = vmatpush1.msra.mxu0 0.0
    %533 = vmatprep.subr.mxu0 0.0
    %534 = vmatpush1.msra.mxu0 0.0
    %535 = vmatprep.subr.mxu0 0.0
    %536 = vmatpush1.msra.mxu0 0.0
    %537 = vmatprep.subr.mxu0 0.0
    %538 = vmatpush1.msra.mxu0 0.0
    %539 = vmatprep.subr.mxu0 0.0
    %540 = vmatpush1.msra.mxu0 0.0
    %541 = vmatprep.subr.mxu0 0.0
    %542 = vmatpush1.msra.mxu0 0.0
    %543 = vmatprep.subr.mxu0 0.0
    %544 = vmatpush1.msra.mxu0 0.0
    %545 = vmatprep.subr.mxu0 0.0
    %546 = vmatpush1.msra.mxu0 0.0
    %547 = vmatprep.subr.mxu0 0.0
    %548 = vmatpush1.msra.mxu0 0.0
    %549 = vmatprep.subr.mxu0 0.0
    %550 = vmatpush1.msra.mxu0 0.0
    %551 = vmatprep.mubr.f32.mxu0 0.0
    %552 = vmatmul.mubr.f32.gmra.mrb[0].mxu0 %v384
    %v553 = vpop.f32.mrb[0].mxu0
    %v554 = vadd.f32 0.0, %v553
    %v555 = vpop.f32.mrb[0].mxu0
    %556 = vdwg.mxu0
    %v557 = vmul.f32 %v373, %v468
    %v558 = vadd.f32 %v557, %v554
    %559 = vst [vmem:[#allocation10] sm:$0xff] %v558
    // Predicated region
    $region58: #{tpu_custom_call.1} parent=1 // pred_check
      _
    $region59: #{tpu_custom_call.1} parent=1 // pred_check_branch
      %561 = sbr.rel (0) target = $region61
    $region60: #{tpu_custom_call.1} parent=1 // pred_region
      %s563 = ssub.s32 128, 128
      %564 = vsyncadd [#allocation4], %s563
      %s566 = sshll.u32 [#allocation10], 4
      %s567 = int_to_ptr.vmem [resolvable:$true] %s566
      %569 = dma.vmem_to_hbm [thread:$0]  %s567, 128, %s10, [#allocation4]
    $region61: #{tpu_custom_call.1} parent=1 // pred_fallthru
      _
    // Predicated region
    $region62: #{tpu_custom_call.1} parent=1 // pred_check
      _
    $region63: #{tpu_custom_call.1} parent=1 // pred_check_branch
      %571 = sbr.rel (0) target = $region65
    $region64: #{tpu_custom_call.1} parent=1 // pred_region
      %572 = dma.done [#allocation4], 128
    $region65: #{tpu_custom_call.1} parent=1 // pred_fallthru
      _
    %573 = vsyncpa [#allocation3], 1
    %574 = vsyncpa [#allocation6], 1
    %575 = vsyncpa [#allocation9], 1
    %576 = vsyncpa [#allocation4], 1

</llo_original>
